<compile_context>
chip_gen: v6e
topology: v6e:2x2x1
jax: 0.10.0
libtpu: 0.0.40
codegen_flags: <defaults>
</compile_context>

<pallas_src>
import jax
import jax.numpy as jnp
import numpy as np
from jax import lax
from jax.experimental import pallas as pl
from jax.experimental.pallas import tpu as pltpu

KH = KW = 3                      # 3x3 convs, stride 1, padding 1
COMPUTE_DTYPE = jnp.bfloat16     # MXU-native inputs; accumulation stays f32


# ---------------------------------------------------------------------------
# Host-side constant builders (shape-only, tiny)
# ---------------------------------------------------------------------------
def _interp_matrix(n_in, n_out):
    """1-D linear interpolation matrix, align_corners=True (rows: outputs)."""
    A = np.zeros((n_out, n_in), np.float32)
    if n_in == 1:
        A[:, 0] = 1.0
        return A
    src = np.arange(n_out, dtype=np.float64) * (n_in - 1) / (n_out - 1)
    i0 = np.clip(np.floor(src).astype(np.int64), 0, n_in - 2)
    f = (src - i0).astype(np.float32)
    A[np.arange(n_out), i0] = 1.0 - f
    A[np.arange(n_out), i0 + 1] = f
    return A


def _shift_select(W):
    """S[kw, j, J] = 1 iff unpadded input column j feeds output column J via tap kw."""
    S = np.zeros((KW, W, W), np.float32)
    for kw in range(KW):
        for j in range(W):
            J = j - kw + 1
            if 0 <= J < W:
                S[kw, j, J] = 1.0
    return S


def _fold_bn(w_oihw, gamma, beta, mean, var, eps=1e-5):
    """Fold eval-mode BatchNorm into conv weight (OIHW) + per-channel bias."""
    scale = gamma / jnp.sqrt(var + eps)
    return w_oihw * scale[:, None, None, None], beta - scale * mean


def _band_weights(w_oihw, W, group_slices):
    """Banded RHS for the lane-dense conv formulation.

    For an LHS whose columns are (kh-major)[ spatial column j, channel c within
    each channel group ] of the H-padded activation rows I..I+2, LHS @ RHS is the
    3x3 'same' conv with output lane layout J*Cout + co.  W-padding is implicit
    (out-of-range taps are simply absent from the band).
    Returns (KH * W * sum(group widths), W * Cout).
    """
    Cout = w_oihw.shape[0]
    w_hwio = jnp.transpose(w_oihw, (2, 3, 1, 0))          # (KH, KW, Cin_total, Cout)
    S = jnp.asarray(_shift_select(W))                     # (KW, W, W)
    blocks = []
    for c0, c1 in group_slices:
        wg = w_hwio[:, :, c0:c1, :]                       # (KH, KW, gw, Cout)
        bg = jnp.einsum("xjJ,hxco->hjcJo", S, wg)         # (KH, W, gw, W, Cout)
        blocks.append(bg.reshape(KH, W * (c1 - c0), W * Cout))
    band = jnp.concatenate(blocks, axis=1)                # (KH, L, W*Cout)
    return band.reshape(KH * band.shape[1], W * Cout)


# ---------------------------------------------------------------------------
# Pallas kernel: upsample2x -> conv1+BN+ReLU -> concat(rem) -> conv2+BN+ReLU
# ---------------------------------------------------------------------------
def _conv2x_kernel(x_ref, rem_ref, aup_ref, bup_ref,
                   w1_ref, b1_ref, w2_ref, b2_ref, o_ref):
    """Layouts (lane axis = flattened spatial_col*channel, always last):
      x_ref  : (NB, h, w*Cin)        low-res input, NHWC flattened
      rem_ref: (NB, H, W*Cout)       skip connection, NHWC flattened
      aup_ref: (NB*H, NB*h)          block-diag row-interpolation matrix (f32)
      bup_ref: (w*Cin, W*Cin)        column interpolation = kron(A_w, I_Cin) (f32)
      w1_ref : (3*W*Cin,    W*Cout)  banded conv1 weights, BN folded (bf16)
      w2_ref : (3*2*W*Cout, W*Cout)  banded conv2 weights, BN folded (bf16)
      b1_ref, b2_ref : (1, W*Cout)   folded BN bias per output lane (f32)
      o_ref  : (NB, H, W*Cout)       lane-dense output slab (W*Cout = 128 here)
    """
    NB, h, _ = x_ref.shape
    _, H, wcout = o_ref.shape
    wc1 = bup_ref.shape[1]                                 # W * Cin
    cdt = w1_ref.dtype                                     # compute dtype (bf16)

    # ---- bilinear 2x upsample (align_corners=True) as two small matmuls ----
    x2 = x_ref[...].reshape(NB * h, x_ref.shape[2])
    up = jnp.dot(x2, bup_ref[...], preferred_element_type=jnp.float32)   # (NB*h, W*Cin)
    up = jnp.dot(aup_ref[...], up, preferred_element_type=jnp.float32)   # (NB*H, W*Cin)

    def band_conv(act_3d, w_ref, b_ref):
        # act_3d: (NB, H, L) f32.  Zero-pad H in-kernel, stack the three kh
        # row-windows on the lane axis and issue ONE lane-dense MXU matmul.
        L = act_3d.shape[-1]
        zrow = jnp.zeros((NB, 1, L), act_3d.dtype)
        p = jnp.concatenate([zrow, act_3d, zrow], axis=1)                 # (NB, H+2, L)
        lhs = jnp.concatenate([p[:, kh:kh + H, :] for kh in range(KH)], axis=-1)
        lhs = lhs.reshape(NB * H, KH * L).astype(cdt)                     # bf16 MXU input
        acc = jnp.dot(lhs, w_ref[...], preferred_element_type=jnp.float32)
        return jnp.maximum(acc + b_ref[...], 0.0)                         # f32 epilogue

    # conv1 + BN + ReLU
    y1 = band_conv(up.reshape(NB, H, wc1), w1_ref, b1_ref)                # (NB*H, W*Cout)

    # channel concat with rem (block lane layout: [conv1-out | rem]), conv2 + BN + ReLU
    cat = jnp.concatenate([y1.reshape(NB, H, wcout), rem_ref[...]], axis=-1)
    y2 = band_conv(cat, w2_ref, b2_ref)                                   # (NB*H, W*Cout)

    o_ref[...] = y2.reshape(NB, H, wcout).astype(o_ref.dtype)


# ---------------------------------------------------------------------------
# Wrapper
# ---------------------------------------------------------------------------
def conv2x_forward(x, rem, params, *, block_batch=None, compute_dtype=COMPUTE_DTYPE):
    """Conv2x forward (eval-mode BN).  x: (N,Cin,h,w), rem: (N,Cout,2h,2w), NCHW."""
    N, Cin, h, w = x.shape
    _, Cout, H, W = rem.shape
    assert (H, W) == (2 * h, 2 * w), "rem must have the 2x-upsampled resolution"
    NB = N if block_batch is None else block_batch
    assert N % NB == 0

    # Fold BN into conv weights/bias, build banded lane-dense RHS + bias rows.
    w1f, b1f = _fold_bn(params["w1"], *params["bn1"])
    w2f, b2f = _fold_bn(params["w2"], *params["bn2"])
    band1 = _band_weights(w1f, W, [(0, Cin)]).astype(compute_dtype)          # (3*W*Cin,   W*Cout)
    band2 = _band_weights(w2f, W, [(0, Cout), (Cout, 2 * Cout)]).astype(compute_dtype)
    b1row = jnp.tile(b1f, W).reshape(1, W * Cout).astype(jnp.float32)
    b2row = jnp.tile(b2f, W).reshape(1, W * Cout).astype(jnp.float32)

    # Upsampling matrices: block-diagonal row interp (per batch block), and
    # column interp acting directly on the flattened (w, Cin) lane axis.
    a_h = _interp_matrix(h, H)
    a_w = _interp_matrix(w, W)
    aup = jnp.asarray(np.kron(np.eye(NB, dtype=np.float32), a_h))            # (NB*H, NB*h)
    bup = jnp.asarray(np.kron(a_w.T, np.eye(Cin, dtype=np.float32)))         # (w*Cin, W*Cin)

    # NCHW -> NHWC -> lane-flattened slabs (boundary transposes; would ideally
    # be fused into the producer graph).
    x_r = jnp.transpose(x, (0, 2, 3, 1)).reshape(N, h, w * Cin)
    rem_r = jnp.transpose(rem, (0, 2, 3, 1)).reshape(N, H, W * Cout)

    out_flat = pl.pallas_call(
        _conv2x_kernel,
        out_shape=jax.ShapeDtypeStruct((N, H, W * Cout), x.dtype),
        grid=(N // NB,),
        in_specs=[
            pl.BlockSpec((NB, h, w * Cin), lambda b: (b, 0, 0)),             # x
            pl.BlockSpec((NB, H, W * Cout), lambda b: (b, 0, 0)),            # rem
            pl.BlockSpec((NB * H, NB * h), lambda b: (0, 0)),                # aup
            pl.BlockSpec((w * Cin, W * Cin), lambda b: (0, 0)),              # bup
            pl.BlockSpec((KH * W * Cin, W * Cout), lambda b: (0, 0)),        # band1
            pl.BlockSpec((1, W * Cout), lambda b: (0, 0)),                   # b1
            pl.BlockSpec((KH * 2 * W * Cout, W * Cout), lambda b: (0, 0)),   # band2
            pl.BlockSpec((1, W * Cout), lambda b: (0, 0)),                   # b2
        ],
        out_specs=pl.BlockSpec((NB, H, W * Cout), lambda b: (b, 0, 0)),
        compiler_params=pltpu.CompilerParams(
            dimension_semantics=("parallel",),
            vmem_limit_bytes=32 * 1024 * 1024,
        ),
    )(x_r, rem_r, aup, bup, band1, b1row, band2, b2row)

    # lane-dense slab -> NCHW (free reshape + one boundary transpose)
    return jnp.transpose(out_flat.reshape(N, H, W, Cout), (0, 3, 1, 2))


# ---------------------------------------------------------------------------
# Plain-JAX reference (independent math path)
# ---------------------------------------------------------------------------
def _upsample2x_ref(x):
    N, C, h, w = x.shape
    H, W = 2 * h, 2 * w
    ys = jnp.arange(H, dtype=jnp.float32) * ((h - 1) / (H - 1))
    xs = jnp.arange(W, dtype=jnp.float32) * ((w - 1) / (W - 1))
    y0 = jnp.clip(jnp.floor(ys).astype(jnp.int32), 0, h - 2)
    x0 = jnp.clip(jnp.floor(xs).astype(jnp.int32), 0, w - 2)
    fy = (ys - y0)[None, None, :, None]
    fx = (xs - x0)[None, None, None, :]
    g = lambda yi, xi: x[:, :, yi, :][:, :, :, xi]
    return (g(y0, x0) * (1 - fy) * (1 - fx) + g(y0, x0 + 1) * (1 - fy) * fx
            + g(y0 + 1, x0) * fy * (1 - fx) + g(y0 + 1, x0 + 1) * fy * fx)


def _conv_bn_relu_ref(x, w, bn, eps=1e-5):
    gamma, beta, mean, var = bn
    y = lax.conv_general_dilated(x, w, (1, 1), ((1, 1), (1, 1)),
                                 dimension_numbers=("NCHW", "OIHW", "NCHW"))
    y = (y - mean[None, :, None, None]) / jnp.sqrt(var + eps)[None, :, None, None]
    y = gamma[None, :, None, None] * y + beta[None, :, None, None]
    return jnp.maximum(y, 0.0)


def reference_forward(x, rem, params):
    up = _upsample2x_ref(x)
    y = _conv_bn_relu_ref(up, params["w1"], params["bn1"])
    cat = jnp.concatenate([y, rem], axis=1)
    return _conv_bn_relu_ref(cat, params["w2"], params["bn2"])


if __name__ == "__main__":
    # Small shapes: Conv2x(in_channels=4, out_channels=8); W*Cout = 16*8 = 128
    # keeps the output slab exactly lane-dense.
    N, Cin, Cout = 2, 4, 8
    h, w = 8, 8
    H, W = 2 * h, 2 * w

    key = jax.random.PRNGKey(0)
    keys = jax.random.split(key, 6)

    x = jax.random.normal(keys[0], (N, Cin, h, w), dtype=jnp.float32)
    rem = jax.random.normal(keys[1], (N, Cout, H, W), dtype=jnp.float32)

    def bn_init(k):
        k1, k2, k3, k4 = jax.random.split(k, 4)
        gamma = 1.0 + 0.2 * jax.random.normal(k1, (Cout,), jnp.float32)
        beta = 0.1 * jax.random.normal(k2, (Cout,), jnp.float32)
        mean = 0.3 * jax.random.normal(k3, (Cout,), jnp.float32)
        var = 0.5 + jax.random.uniform(k4, (Cout,), jnp.float32)
        return gamma, beta, mean, var

    params = {
        "w1": jax.random.normal(keys[2], (Cout, Cin, KH, KW), jnp.float32)
              / np.sqrt(Cin * KH * KW),
        "bn1": bn_init(keys[3]),
        "w2": jax.random.normal(keys[4], (Cout, 2 * Cout, KH, KW), jnp.float32)
              / np.sqrt(2 * Cout * KH * KW),
        "bn2": bn_init(keys[5]),
    }

    out = jax.block_until_ready(conv2x_forward(x, rem, params))
    ref = jax.block_until_ready(reference_forward(x, rem, params))

    assert out.shape == (N, Cout, H, W), out.shape
    # Tolerance accounts for bf16 MXU inputs (f32 accumulation): ~0.5% relative.
    np.testing.assert_allclose(np.asarray(out), np.asarray(ref), rtol=5e-2, atol=5e-2)

    print("KERNEL_OK")
</pallas_src>

<mosaic_0001>
module attributes {stable_mosaic.version = 11 : i64} {
  func.func @_conv2x_kernel(%arg0: i32, %arg1: memref<2x8x32xf32, #tpu.memory_space<vmem>>, %arg2: memref<2x16x128xf32, #tpu.memory_space<vmem>>, %arg3: memref<32x16xf32, #tpu.memory_space<vmem>>, %arg4: memref<32x64xf32, #tpu.memory_space<vmem>>, %arg5: memref<192x128xbf16, #tpu.memory_space<vmem>>, %arg6: memref<1x128xf32, #tpu.memory_space<vmem>>, %arg7: memref<768x128xbf16, #tpu.memory_space<vmem>>, %arg8: memref<1x128xf32, #tpu.memory_space<vmem>>, %arg9: memref<2x16x128xf32, #tpu.memory_space<vmem>>) attributes {dimension_semantics = [#tpu.dimension_semantics<parallel>], iteration_bounds = array<i64: 1>, scalar_prefetch = 0 : i64, scratch_operands = 0 : i64, tpu.core_type = #tpu.core_type<tc>, window_params = [{transform_indices = @transform_0, window_bounds = array<i64: 2, 8, 32>}, {transform_indices = @transform_1, window_bounds = array<i64: 2, 16, 128>}, {pipeline_mode = #tpu.pipeline_mode<synchronous>, transform_indices = @transform_2, window_bounds = array<i64: 32, 16>}, {pipeline_mode = #tpu.pipeline_mode<synchronous>, transform_indices = @transform_3, window_bounds = array<i64: 32, 64>}, {pipeline_mode = #tpu.pipeline_mode<synchronous>, transform_indices = @transform_4, window_bounds = array<i64: 192, 128>}, {pipeline_mode = #tpu.pipeline_mode<synchronous>, transform_indices = @transform_5, window_bounds = array<i64: 1, 128>}, {pipeline_mode = #tpu.pipeline_mode<synchronous>, transform_indices = @transform_6, window_bounds = array<i64: 768, 128>}, {pipeline_mode = #tpu.pipeline_mode<synchronous>, transform_indices = @transform_7, window_bounds = array<i64: 1, 128>}, {transform_indices = @transform_8, window_bounds = array<i64: 2, 16, 128>}]} {
    %c0 = arith.constant 0 : index
    %c0_0 = arith.constant 0 : index
    %c0_1 = arith.constant 0 : index
    %0 = vector.load %arg1[%c0, %c0_0, %c0_1] : memref<2x8x32xf32, #tpu.memory_space<vmem>>, vector<2x8x32xf32>
    %1 = vector.shape_cast %0 : vector<2x8x32xf32> to vector<16x32xf32>
    %c0_2 = arith.constant 0 : index
    %c0_3 = arith.constant 0 : index
    %2 = vector.load %arg4[%c0_2, %c0_3] : memref<32x64xf32, #tpu.memory_space<vmem>>, vector<32x64xf32>
    %cst = arith.constant dense<0.000000e+00> : vector<16x64xf32>
    %3 = tpu.matmul %1, %2, %cst {dimension_numbers = #tpu.dot_dimension_numbers<[1], [0], [0], [1], [0, 0, 1, 1], [], []>} : vector<16x32xf32>, vector<32x64xf32>, vector<16x64xf32> -> vector<16x64xf32>
    %c0_4 = arith.constant 0 : index
    %c0_5 = arith.constant 0 : index
    %4 = vector.load %arg3[%c0_4, %c0_5] : memref<32x16xf32, #tpu.memory_space<vmem>>, vector<32x16xf32>
    %cst_6 = arith.constant dense<0.000000e+00> : vector<32x64xf32>
    %5 = tpu.matmul %4, %3, %cst_6 {dimension_numbers = #tpu.dot_dimension_numbers<[1], [0], [0], [1], [0, 0, 1, 1], [], []>} : vector<32x16xf32>, vector<16x64xf32>, vector<32x64xf32> -> vector<32x64xf32>
    %6 = vector.shape_cast %5 : vector<32x64xf32> to vector<2x16x64xf32>
    %cst_7 = arith.constant 0.000000e+00 : f32
    %7 = vector.broadcast %cst_7 : f32 to vector<2x1x64xf32>
    %8 = tpu.concatenate %7, %6, %7 in 1 : vector<2x1x64xf32>, vector<2x16x64xf32>, vector<2x1x64xf32> -> vector<2x18x64xf32>
    %9 = vector.extract_strided_slice %8 {offsets = [0, 0, 0], sizes = [2, 16, 64], strides = [1, 1, 1]} : vector<2x18x64xf32> to vector<2x16x64xf32>
    %10 = vector.extract_strided_slice %8 {offsets = [0, 1, 0], sizes = [2, 16, 64], strides = [1, 1, 1]} : vector<2x18x64xf32> to vector<2x16x64xf32>
    %11 = vector.extract_strided_slice %8 {offsets = [0, 2, 0], sizes = [2, 16, 64], strides = [1, 1, 1]} : vector<2x18x64xf32> to vector<2x16x64xf32>
    %12 = tpu.concatenate %9, %10, %11 in 2 : vector<2x16x64xf32>, vector<2x16x64xf32>, vector<2x16x64xf32> -> vector<2x16x192xf32>
    %13 = vector.shape_cast %12 : vector<2x16x192xf32> to vector<32x192xf32>
    %14 = arith.truncf %13 : vector<32x192xf32> to vector<32x192xbf16>
    %c0_8 = arith.constant 0 : index
    %c0_9 = arith.constant 0 : index
    %15 = vector.load %arg5[%c0_8, %c0_9] : memref<192x128xbf16, #tpu.memory_space<vmem>>, vector<192x128xbf16>
    %cst_10 = arith.constant dense<0.000000e+00> : vector<32x128xf32>
    %16 = tpu.matmul %14, %15, %cst_10 {dimension_numbers = #tpu.dot_dimension_numbers<[1], [0], [0], [1], [0, 0, 1, 1], [], []>} : vector<32x192xbf16>, vector<192x128xbf16>, vector<32x128xf32> -> vector<32x128xf32>
    %c0_11 = arith.constant 0 : index
    %c0_12 = arith.constant 0 : index
    %17 = vector.load %arg6[%c0_11, %c0_12] : memref<1x128xf32, #tpu.memory_space<vmem>>, vector<1x128xf32>
    %18 = vector.broadcast %17 : vector<1x128xf32> to vector<32x128xf32>
    %19 = arith.addf %16, %18 : vector<32x128xf32>
    %cst_13 = arith.constant 0.000000e+00 : f32
    %20 = vector.broadcast %cst_13 : f32 to vector<32x128xf32>
    %21 = arith.maximumf %19, %20 : vector<32x128xf32>
    %22 = vector.shape_cast %21 : vector<32x128xf32> to vector<2x16x128xf32>
    %c0_14 = arith.constant 0 : index
    %c0_15 = arith.constant 0 : index
    %c0_16 = arith.constant 0 : index
    %23 = vector.load %arg2[%c0_14, %c0_15, %c0_16] : memref<2x16x128xf32, #tpu.memory_space<vmem>>, vector<2x16x128xf32>
    %24 = tpu.concatenate %22, %23 in 2 : vector<2x16x128xf32>, vector<2x16x128xf32> -> vector<2x16x256xf32>
    %cst_17 = arith.constant 0.000000e+00 : f32
    %25 = vector.broadcast %cst_17 : f32 to vector<2x1x256xf32>
    %26 = tpu.concatenate %25, %24, %25 in 1 : vector<2x1x256xf32>, vector<2x16x256xf32>, vector<2x1x256xf32> -> vector<2x18x256xf32>
    %27 = vector.extract_strided_slice %26 {offsets = [0, 0, 0], sizes = [2, 16, 256], strides = [1, 1, 1]} : vector<2x18x256xf32> to vector<2x16x256xf32>
    %28 = vector.extract_strided_slice %26 {offsets = [0, 1, 0], sizes = [2, 16, 256], strides = [1, 1, 1]} : vector<2x18x256xf32> to vector<2x16x256xf32>
    %29 = vector.extract_strided_slice %26 {offsets = [0, 2, 0], sizes = [2, 16, 256], strides = [1, 1, 1]} : vector<2x18x256xf32> to vector<2x16x256xf32>
    %30 = tpu.concatenate %27, %28, %29 in 2 : vector<2x16x256xf32>, vector<2x16x256xf32>, vector<2x16x256xf32> -> vector<2x16x768xf32>
    %31 = vector.shape_cast %30 : vector<2x16x768xf32> to vector<32x768xf32>
    %32 = arith.truncf %31 : vector<32x768xf32> to vector<32x768xbf16>
    %c0_18 = arith.constant 0 : index
    %c0_19 = arith.constant 0 : index
    %33 = vector.load %arg7[%c0_18, %c0_19] : memref<768x128xbf16, #tpu.memory_space<vmem>>, vector<768x128xbf16>
    %cst_20 = arith.constant dense<0.000000e+00> : vector<32x128xf32>
    %34 = tpu.matmul %32, %33, %cst_20 {dimension_numbers = #tpu.dot_dimension_numbers<[1], [0], [0], [1], [0, 0, 1, 1], [], []>} : vector<32x768xbf16>, vector<768x128xbf16>, vector<32x128xf32> -> vector<32x128xf32>
    %c0_21 = arith.constant 0 : index
    %c0_22 = arith.constant 0 : index
    %35 = vector.load %arg8[%c0_21, %c0_22] : memref<1x128xf32, #tpu.memory_space<vmem>>, vector<1x128xf32>
    %36 = vector.broadcast %35 : vector<1x128xf32> to vector<32x128xf32>
    %37 = arith.addf %34, %36 : vector<32x128xf32>
    %cst_23 = arith.constant 0.000000e+00 : f32
    %38 = vector.broadcast %cst_23 : f32 to vector<32x128xf32>
    %39 = arith.maximumf %37, %38 : vector<32x128xf32>
    %40 = vector.shape_cast %39 : vector<32x128xf32> to vector<2x16x128xf32>
    %c0_24 = arith.constant 0 : index
    %c0_25 = arith.constant 0 : index
    %c0_26 = arith.constant 0 : index
    %41 = vector.load %arg9[%c0_24, %c0_25, %c0_26] : memref<2x16x128xf32, #tpu.memory_space<vmem>>, vector<2x16x128xf32>
    tpu.vector_store %arg9[%c0_24, %c0_25, %c0_26], %40 {strides = array<i32>} : memref<2x16x128xf32, #tpu.memory_space<vmem>>, vector<2x16x128xf32>,
    return
  }
  func.func @transform_0(%arg0: i32) -> (i32, i32, i32) {
    %c0_i32 = arith.constant 0 : i32
    %c0_i32_0 = arith.constant 0 : i32
    %c0_i32_1 = arith.constant 0 : i32
    return %arg0, %c0_i32, %c0_i32_0 : i32, i32, i32
  }
  func.func @transform_1(%arg0: i32) -> (i32, i32, i32) {
    %c0_i32 = arith.constant 0 : i32
    %c0_i32_0 = arith.constant 0 : i32
    %c0_i32_1 = arith.constant 0 : i32
    return %arg0, %c0_i32, %c0_i32_0 : i32, i32, i32
  }
  func.func @transform_2(%arg0: i32) -> (i32, i32) {
    %c0_i32 = arith.constant 0 : i32
    %c0_i32_0 = arith.constant 0 : i32
    %c0_i32_1 = arith.constant 0 : i32
    return %c0_i32, %c0_i32_0 : i32, i32
  }
  func.func @transform_3(%arg0: i32) -> (i32, i32) {
    %c0_i32 = arith.constant 0 : i32
    %c0_i32_0 = arith.constant 0 : i32
    %c0_i32_1 = arith.constant 0 : i32
    return %c0_i32, %c0_i32_0 : i32, i32
  }
  func.func @transform_4(%arg0: i32) -> (i32, i32) {
    %c0_i32 = arith.constant 0 : i32
    %c0_i32_0 = arith.constant 0 : i32
    %c0_i32_1 = arith.constant 0 : i32
    return %c0_i32, %c0_i32_0 : i32, i32
  }
  func.func @transform_5(%arg0: i32) -> (i32, i32) {
    %c0_i32 = arith.constant 0 : i32
    %c0_i32_0 = arith.constant 0 : i32
    %c0_i32_1 = arith.constant 0 : i32
    return %c0_i32, %c0_i32_0 : i32, i32
  }
  func.func @transform_6(%arg0: i32) -> (i32, i32) {
    %c0_i32 = arith.constant 0 : i32
    %c0_i32_0 = arith.constant 0 : i32
    %c0_i32_1 = arith.constant 0 : i32
    return %c0_i32, %c0_i32_0 : i32, i32
  }
  func.func @transform_7(%arg0: i32) -> (i32, i32) {
    %c0_i32 = arith.constant 0 : i32
    %c0_i32_0 = arith.constant 0 : i32
    %c0_i32_1 = arith.constant 0 : i32
    return %c0_i32, %c0_i32_0 : i32, i32
  }
  func.func @transform_8(%arg0: i32) -> (i32, i32, i32) {
    %c0_i32 = arith.constant 0 : i32
    %c0_i32_0 = arith.constant 0 : i32
    %c0_i32_1 = arith.constant 0 : i32
    return %arg0, %c0_i32, %c0_i32_0 : i32, i32, i32
  }
}

</mosaic_0001>

<llo_original>
// kernel: tpu_custom_call.1
$region0: #{tpu_custom_call.1}
  #allocation0 [shape = 'u32[]', space=smem, size = 0x4, offset = 0x4, fixed_abs, tag = 'smem constant byte address 0x4 - core index']
  #allocation1 [shape = 'u32[144,128]{1,0:T(1,128)}', space=vmem, size = 0x12000, scoped, tag = 'internal scratch']
  %s0 = inlined_call_operand.vmem [shape: f32[2,8,32], index: 0, kind: input, shape index: {}]
  %s1 = inlined_call_operand.vmem [shape: f32[2,16,128], index: 1, kind: input, shape index: {}]
  %s2 = inlined_call_operand.vmem [shape: f32[32,16], index: 2, kind: input, shape index: {}]
  %s3 = inlined_call_operand.hbm [shape: f32[32,64], index: 3, kind: input, shape index: {}]
  %s4 = inlined_call_operand.hbm [shape: bf16[192,128], index: 4, kind: input, shape index: {}]
  %s5 = inlined_call_operand.vmem [shape: f32[1,128], index: 5, kind: input, shape index: {}]
  %s6 = inlined_call_operand.hbm [shape: bf16[768,128], index: 6, kind: input, shape index: {}]
  %s7 = inlined_call_operand.vmem [shape: f32[1,128], index: 7, kind: input, shape index: {}]
  %s8 = inlined_call_operand.hbm [shape: f32[2,16,128], index: 8, kind: output, shape index: {}]
  %s9 = sld [smem:[#allocation0]]
  $region54: #{tpu_custom_call.1} parent=0
    _
  %s11 = ssub.s32 1, %s9
  %s12 = scalar_select 0, %s11, %s9
  $region1: #{tpu_custom_call.1} parent=0
    #allocation2 [shape = 'u8[16384]{0}', space=vmem, size = 0x4000, scoped, tag = 'input window, operand 3, single buffered']
    #allocation3 [shape = 's32[1]{0}', space=sflag, size = 0x4, scoped, tag = 'scoped memory for tpu_custom_call.1']
    #allocation4 [shape = 's32[1]{0}', space=sflag, size = 0x4, scoped, tag = 'scoped memory for tpu_custom_call.1']
    #allocation5 [shape = 'u8[49152]{0}', space=vmem, size = 0xc000, scoped, tag = 'input window, operand 4, single buffered']
    #allocation6 [shape = 's32[1]{0}', space=sflag, size = 0x4, scoped, tag = 'scoped memory for tpu_custom_call.1']
    #allocation7 [shape = 'u8[196608]{0}', space=vmem, size = 0x30000, scoped, tag = 'input window, operand 6, single buffered']
    #allocation8 [shape = 'u8[16384]{0}', space=vmem, size = 0x4000, scoped, tag = 'output window, operand 0, single buffered']
    %13 = vsyncpa [#allocation3], 0
    %14 = vsyncpa [#allocation6], 0
    %15 = vsyncpa [#allocation4], 0
    // Predicated region
    $region2: #{tpu_custom_call.1} parent=1 // pred_check
      _
    $region3: #{tpu_custom_call.1} parent=1 // pred_check_branch
      %17 = sbr.rel (0) target = $region5
    $region4: #{tpu_custom_call.1} parent=1 // pred_region
      _
    $region5: #{tpu_custom_call.1} parent=1 // pred_fallthru
      _
    // Predicated region
    $region6: #{tpu_custom_call.1} parent=1 // pred_check
      _
    $region7: #{tpu_custom_call.1} parent=1 // pred_check_branch
      %19 = sbr.rel (0) target = $region9
    $region8: #{tpu_custom_call.1} parent=1 // pred_region
      _
    $region9: #{tpu_custom_call.1} parent=1 // pred_fallthru
      _
    // Predicated region
    $region10: #{tpu_custom_call.1} parent=1 // pred_check
      _
    $region11: #{tpu_custom_call.1} parent=1 // pred_check_branch
      %21 = sbr.rel (0) target = $region13
    $region12: #{tpu_custom_call.1} parent=1 // pred_region
      _
    $region13: #{tpu_custom_call.1} parent=1 // pred_fallthru
      _
    // Predicated region
    $region14: #{tpu_custom_call.1} parent=1 // pred_check
      _
    $region15: #{tpu_custom_call.1} parent=1 // pred_check_branch
      %23 = sbr.rel (0) target = $region17
    $region16: #{tpu_custom_call.1} parent=1 // pred_region
      %s25 = ssub.s32 512, 512
      %26 = vsyncadd [#allocation3], %s25
      %s27 = sshll.u32 [#allocation2], 4
      %s28 = int_to_ptr.vmem [resolvable:$true] %s27
      %33 = dma.hbm_to_vmem [thread:$0]  %s3, 512, %s28, [#allocation3], 128, 128, 8
    $region17: #{tpu_custom_call.1} parent=1 // pred_fallthru
      _
    // Predicated region
    $region18: #{tpu_custom_call.1} parent=1 // pred_check
      _
    $region19: #{tpu_custom_call.1} parent=1 // pred_check_branch
      %35 = sbr.rel (0) target = $region21
    $region20: #{tpu_custom_call.1} parent=1 // pred_region
      %s37 = ssub.s32 1536, 1536
      %38 = vsyncadd [#allocation6], %s37
      %s39 = sshll.u32 [#allocation5], 4
      %s40 = int_to_ptr.vmem [resolvable:$true] %s39
      %45 = dma.hbm_to_vmem [thread:$0]  %s4, 1536, %s40, [#allocation6], 64, 64, 4
    $region21: #{tpu_custom_call.1} parent=1 // pred_fallthru
      _
    // Predicated region
    $region22: #{tpu_custom_call.1} parent=1 // pred_check
      _
    $region23: #{tpu_custom_call.1} parent=1 // pred_check_branch
      %47 = sbr.rel (0) target = $region25
    $region24: #{tpu_custom_call.1} parent=1 // pred_region
      _
    $region25: #{tpu_custom_call.1} parent=1 // pred_fallthru
      _
    // Predicated region
    $region26: #{tpu_custom_call.1} parent=1 // pred_check
      _
    $region27: #{tpu_custom_call.1} parent=1 // pred_check_branch
      %49 = sbr.rel (0) target = $region29
    $region28: #{tpu_custom_call.1} parent=1 // pred_region
      %s51 = ssub.s32 6144, 6144
      %52 = vsyncadd [#allocation6], %s51
      %s53 = sshll.u32 [#allocation7], 4
      %s54 = int_to_ptr.vmem [resolvable:$true] %s53
      %59 = dma.hbm_to_vmem [thread:$0]  %s6, 6144, %s54, [#allocation6], 64, 64, 4
    $region29: #{tpu_custom_call.1} parent=1 // pred_fallthru
      _
    // Predicated region
    $region30: #{tpu_custom_call.1} parent=1 // pred_check
      _
    $region31: #{tpu_custom_call.1} parent=1 // pred_check_branch
      %61 = sbr.rel (0) target = $region33
    $region32: #{tpu_custom_call.1} parent=1 // pred_region
      _
    $region33: #{tpu_custom_call.1} parent=1 // pred_fallthru
      _
    // Predicated region
    $region34: #{tpu_custom_call.1} parent=1 // pred_check
      _
    $region35: #{tpu_custom_call.1} parent=1 // pred_check_branch
      %63 = sbr.rel (0) target = $region37
    $region36: #{tpu_custom_call.1} parent=1 // pred_region
      %64 = dma.done [#allocation3], 512
    $region37: #{tpu_custom_call.1} parent=1 // pred_fallthru
      _
    // Predicated region
    $region38: #{tpu_custom_call.1} parent=1 // pred_check
      _
    $region39: #{tpu_custom_call.1} parent=1 // pred_check_branch
      %66 = sbr.rel (0) target = $region41
    $region40: #{tpu_custom_call.1} parent=1 // pred_region
      %67 = dma.done [#allocation6], 1536
    $region41: #{tpu_custom_call.1} parent=1 // pred_fallthru
      _
    // Predicated region
    $region42: #{tpu_custom_call.1} parent=1 // pred_check
      _
    $region43: #{tpu_custom_call.1} parent=1 // pred_check_branch
      %69 = sbr.rel (0) target = $region45
    $region44: #{tpu_custom_call.1} parent=1 // pred_region
      %70 = dma.done [#allocation6], 6144
    $region45: #{tpu_custom_call.1} parent=1 // pred_fallthru
      _
    %v72 = vld [vmem:[%s0] sm:$0xff]
    %v73 = vld [vmem:[%s0 + $0x8] sm:$0xff]
    %v74 = vld [vmem:[#allocation2] sm:$0xff]
    %v75 = vld [vmem:[#allocation2 + $0x8] sm:$0xff]
    %v76 = vld [vmem:[#allocation2 + $0x10] sm:$0xff]
    %v77 = vld [vmem:[#allocation2 + $0x18] sm:$0xff]
    %vm78 = vcmask 261120
    %v80 = vsel %vm78, %v72, 0
    %v83 = vsel %vm78, %v73, 0
    %85 = vmatprep.subr.mxu0 0.0
    %86 = vmatpush1.msra.mxu0 0.0
    %87 = vmatprep.subr.mxu0 0.0
    %88 = vmatpush1.msra.mxu0 0.0
    %89 = vmatprep.subr.mxu0 0.0
    %90 = vmatpush1.msra.mxu0 0.0
    %91 = vmatprep.subr.mxu0 0.0
    %92 = vmatpush1.msra.mxu0 0.0
    %93 = vmatprep.subr.mxu0 0.0
    %94 = vmatpush1.msra.mxu0 0.0
    %95 = vmatprep.subr.mxu0 0.0
    %96 = vmatpush1.msra.mxu0 0.0
    %97 = vmatprep.subr.mxu0 0.0
    %98 = vmatpush1.msra.mxu0 0.0
    %99 = vmatprep.subr.mxu0 0.0
    %100 = vmatpush1.msra.mxu0 0.0
    %101 = vmatprep.subr.mxu0 0.0
    %102 = vmatpush1.msra.mxu0 0.0
    %103 = vmatprep.subr.mxu0 0.0
    %104 = vmatpush1.msra.mxu0 0.0
    %105 = vmatprep.subr.mxu0 0.0
    %106 = vmatpush1.msra.mxu0 0.0
    %107 = vmatprep.subr.mxu0 0.0
    %108 = vmatpush1.msra.mxu0 0.0
    %109 = vmatprep.subr.mxu0 0.0
    %110 = vmatpush1.msra.mxu0 %v77
    %111 = vmatprep.subr.mxu0 0.0
    %112 = vmatpush1.msra.mxu0 %v76
    %113 = vmatprep.subr.mxu0 0.0
    %114 = vmatpush1.msra.mxu0 %v75
    %115 = vmatprep.subr.mxu0 0.0
    %116 = vmatpush1.msra.mxu0 %v74
    %117 = vmatprep.subr.mxu0 0.0
    %118 = vmatpush2.msra.mxu0 0.0
    %119 = vmatprep.subr.mxu0 0.0
    %120 = vmatpush2.msra.mxu0 0.0
    %121 = vmatprep.subr.mxu0 0.0
    %122 = vmatpush2.msra.mxu0 0.0
    %123 = vmatprep.subr.mxu0 0.0
    %124 = vmatpush2.msra.mxu0 0.0
    %125 = vmatprep.subr.mxu0 0.0
    %126 = vmatpush2.msra.mxu0 0.0
    %127 = vmatprep.subr.mxu0 0.0
    %128 = vmatpush2.msra.mxu0 0.0
    %129 = vmatprep.subr.mxu0 0.0
    %130 = vmatpush2.msra.mxu0 0.0
    %131 = vmatprep.subr.mxu0 0.0
    %132 = vmatpush2.msra.mxu0 0.0
    %133 = vmatprep.subr.mxu0 0.0
    %134 = vmatpush2.msra.mxu0 0.0
    %135 = vmatprep.subr.mxu0 0.0
    %136 = vmatpush2.msra.mxu0 0.0
    %137 = vmatprep.subr.mxu0 0.0
    %138 = vmatpush2.msra.mxu0 0.0
    %139 = vmatprep.subr.mxu0 0.0
    %140 = vmatpush2.msra.mxu0 0.0
    %141 = vmatprep.subr.mxu0 0.0
    %142 = vmatpush2.msra.mxu0 0.0
    %143 = vmatprep.subr.mxu0 0.0
    %144 = vmatpush2.msra.mxu0 0.0
    %145 = vmatprep.subr.mxu0 0.0
    %146 = vmatpush2.msra.mxu0 0.0
    %147 = vmatprep.subr.mxu0 0.0
    %148 = vmatpush2.msra.mxu0 0.0
    %149 = vmatprep.mubr.f32.mxu0 0.0
    %150 = vmatmul.mubr.f32.gmra.mxu0 %v80
    %v151 = vpop.f32.mrf.mxu0
    %v152 = vadd.f32 0.0, %v151
    %v153 = vpop.f32.mrf.mxu0
    %154 = vmatprep.mubr.f32.mxu0 0.0
    %155 = vmatmul.mubr.f32.gmra.mxu0 %v83
    %v156 = vpop.f32.mrf.mxu0
    %v157 = vadd.f32 0.0, %v156
    %v158 = vpop.f32.mrf.mxu0
    %159 = vdwg.mxu0
    %v160 = vld [vmem:[%s2] sm:$0xff]
    %v161 = vld [vmem:[%s2 + $0x8] sm:$0xff]
    %v162 = vld [vmem:[%s2 + $0x10] sm:$0xff]
    %v163 = vld [vmem:[%s2 + $0x18] sm:$0xff]
    %vm164 = vcmask 130048
    %v166 = vsel %vm164, %v160, 0
    %v169 = vsel %vm164, %v161, 0
    %v172 = vsel %vm164, %v162, 0
    %v175 = vsel %vm164, %v163, 0
    %177 = vmatprep.subr.mxu0 0.0
    %178 = vmatpush1.msra.mxu0 0.0
    %179 = vmatprep.subr.mxu0 0.0
    %180 = vmatpush1.msra.mxu0 0.0
    %181 = vmatprep.subr.mxu0 0.0
    %182 = vmatpush1.msra.mxu0 0.0
    %183 = vmatprep.subr.mxu0 0.0
    %184 = vmatpush1.msra.mxu0 0.0
    %185 = vmatprep.subr.mxu0 0.0
    %186 = vmatpush1.msra.mxu0 0.0
    %187 = vmatprep.subr.mxu0 0.0
    %188 = vmatpush1.msra.mxu0 0.0
    %189 = vmatprep.subr.mxu0 0.0
    %190 = vmatpush1.msra.mxu0 0.0
    %191 = vmatprep.subr.mxu0 0.0
    %192 = vmatpush1.msra.mxu0 0.0
    %193 = vmatprep.subr.mxu0 0.0
    %194 = vmatpush1.msra.mxu0 0.0
    %195 = vmatprep.subr.mxu0 0.0
    %196 = vmatpush1.msra.mxu0 0.0
    %197 = vmatprep.subr.mxu0 0.0
    %198 = vmatpush1.msra.mxu0 0.0
    %199 = vmatprep.subr.mxu0 0.0
    %200 = vmatpush1.msra.mxu0 0.0
    %201 = vmatprep.subr.mxu0 0.0
    %202 = vmatpush1.msra.mxu0 0.0
    %203 = vmatprep.subr.mxu0 0.0
    %204 = vmatpush1.msra.mxu0 0.0
    %205 = vmatprep.subr.mxu0 0.0
    %206 = vmatpush1.msra.mxu0 %v157
    %207 = vmatprep.subr.mxu0 0.0
    %208 = vmatpush1.msra.mxu0 %v152
    %209 = vmatprep.subr.mxu0 0.0
    %210 = vmatpush2.msra.mxu0 0.0
    %211 = vmatprep.subr.mxu0 0.0
    %212 = vmatpush2.msra.mxu0 0.0
    %213 = vmatprep.subr.mxu0 0.0
    %214 = vmatpush2.msra.mxu0 0.0
    %215 = vmatprep.subr.mxu0 0.0
    %216 = vmatpush2.msra.mxu0 0.0
    %217 = vmatprep.subr.mxu0 0.0
    %218 = vmatpush2.msra.mxu0 0.0
    %219 = vmatprep.subr.mxu0 0.0
    %220 = vmatpush2.msra.mxu0 0.0
    %221 = vmatprep.subr.mxu0 0.0
    %222 = vmatpush2.msra.mxu0 0.0
    %223 = vmatprep.subr.mxu0 0.0
    %224 = vmatpush2.msra.mxu0 0.0
    %225 = vmatprep.subr.mxu0 0.0
    %226 = vmatpush2.msra.mxu0 0.0
    %227 = vmatprep.subr.mxu0 0.0
    %228 = vmatpush2.msra.mxu0 0.0
    %229 = vmatprep.subr.mxu0 0.0
    %230 = vmatpush2.msra.mxu0 0.0
    %231 = vmatprep.subr.mxu0 0.0
    %232 = vmatpush2.msra.mxu0 0.0
    %233 = vmatprep.subr.mxu0 0.0
    %234 = vmatpush2.msra.mxu0 0.0
    %235 = vmatprep.subr.mxu0 0.0
    %236 = vmatpush2.msra.mxu0 0.0
    %237 = vmatprep.subr.mxu0 0.0
    %238 = vmatpush2.msra.mxu0 0.0
    %239 = vmatprep.subr.mxu0 0.0
    %240 = vmatpush2.msra.mxu0 0.0
    %241 = vmatprep.mubr.f32.mxu0 0.0
    %242 = vmatmul.mubr.f32.gmra.mxu0 %v166
    %v243 = vpop.f32.mrf.mxu0
    %v244 = vadd.f32 0.0, %v243
    %v245 = vpop.f32.mrf.mxu0
    %246 = vmatprep.mubr.f32.mxu0 0.0
    %247 = vmatmul.mubr.f32.gmra.mxu0 %v169
    %v248 = vpop.f32.mrf.mxu0
    %v249 = vadd.f32 0.0, %v248
    %v250 = vpop.f32.mrf.mxu0
    %251 = vmatprep.mubr.f32.mxu0 0.0
    %252 = vmatmul.mubr.f32.gmra.mxu0 %v172
    %v253 = vpop.f32.mrf.mxu0
    %v254 = vadd.f32 0.0, %v253
    %v255 = vpop.f32.mrf.mxu0
    %256 = vmatprep.mubr.f32.mxu0 0.0
    %257 = vmatmul.mubr.f32.gmra.mxu0 %v175
    %v258 = vpop.f32.mrf.mxu0
    %v259 = vadd.f32 0.0, %v258
    %v260 = vpop.f32.mrf.mxu0
    %261 = vdwg.mxu0
    %vm266 = vcmask 1040384
    %v267 = vrot.slane %v244, 7
    %v268 = vrot.slane %v249, 7
    %v269 = vsel %vm266, %v267, %v268
    %v270 = vrot.slane %v254, 7
    %v271 = vrot.slane %v259, 7
    %v272 = vsel %vm266, %v270, %v271
    %v279 = vsel %vm266, 0.0, %v267
    %v280 = vsel %vm266, 0.0, %v270
    %v281 = vsel %vm266, %v268, 0.0
    %v282 = vsel %vm266, %v271, 0.0
    %vm287 = vcmask 1046528
    %v288 = vrot.slane %v279, 1
    %v289 = vrot.slane %v269, 1
    %v290 = vsel %vm287, %v288, %v289
    %v291 = vrot.slane %v281, 1
    %v292 = vsel %vm287, %v289, %v291
    %v293 = vrot.slane %v280, 1
    %v294 = vrot.slane %v272, 1
    %v295 = vsel %vm287, %v293, %v294
    %v296 = vrot.slane %v282, 1
    %v297 = vsel %vm287, %v294, %v296
    %298 = vrot.lane.b32.xlu0 %v290, 64
    %v299 = vpop.permute.xlu0 %298
    %300 = vrot.lane.b32.xlu0 %v292, 64
    %v301 = vpop.permute.xlu0 %300
    %302 = vrot.lane.b32.xlu0 %v295, 64
    %v303 = vpop.permute.xlu0 %302
    %304 = vrot.lane.b32.xlu0 %v297, 64
    %v305 = vpop.permute.xlu0 %304
    %vm310 = vcmask 1045504
    %v311 = vrot.slane %v279, 2
    %v312 = vrot.slane %v269, 2
    %v313 = vsel %vm310, %v311, %v312
    %v314 = vrot.slane %v281, 2
    %v315 = vsel %vm310, %v312, %v314
    %v316 = vrot.slane %v280, 2
    %v317 = vrot.slane %v272, 2
    %v318 = vsel %vm310, %v316, %v317
    %v319 = vrot.slane %v282, 2
    %v320 = vsel %vm310, %v317, %v319
    %vm325 = vcmask 523264
    %v326 = vsel %vm325, %v279, %v299
    %v327 = vsel %vm325, %v269, %v301
    %v328 = vsel %vm325, %v280, %v303
    %v329 = vsel %vm325, %v272, %v305
    %v330 = vpack.c.bf16 %v327, %v326
    %v331 = vpack.c.bf16 %v315, %v313
    %v332 = vpack.c.bf16 %v329, %v328
    %v333 = vpack.c.bf16 %v320, %v318
    %v334 = vld [vmem:[#allocation5] sm:$0xf]
    %v335 = vld [vmem:[#allocation5 + $0x4] sm:$0xf]
    %v336 = vld [vmem:[#allocation5 + $0x8] sm:$0xf]
    %v337 = vld [vmem:[#allocation5 + $0xc] sm:$0xf]
    %v338 = vld [vmem:[#allocation5 + $0x10] sm:$0xf]
    %v339 = vld [vmem:[#allocation5 + $0x14] sm:$0xf]
    %v340 = vld [vmem:[#allocation5 + $0x18] sm:$0xf]
    %v341 = vld [vmem:[#allocation5 + $0x1c] sm:$0xf]
    %v342 = vld [vmem:[#allocation5 + $0x20] sm:$0xf]
    %v343 = vld [vmem:[#allocation5 + $0x24] sm:$0xf]
    %v344 = vld [vmem:[#allocation5 + $0x28] sm:$0xf]
    %v345 = vld [vmem:[#allocation5 + $0x2c] sm:$0xf]
    %v346 = vld [vmem:[#allocation5 + $0x30] sm:$0xf]
    %v347 = vld [vmem:[#allocation5 + $0x34] sm:$0xf]
    %v348 = vld [vmem:[#allocation5 + $0x38] sm:$0xf]
    %v349 = vld [vmem:[#allocation5 + $0x3c] sm:$0xf]
    %v350 = vld [vmem:[#allocation5 + $0x40] sm:$0xf]
    %v351 = vld [vmem:[#allocation5 + $0x44] sm:$0xf]
    %v352 = vld [vmem:[#allocation5 + $0x48] sm:$0xf]
    %v353 = vld [vmem:[#allocation5 + $0x4c] sm:$0xf]
    %v354 = vld [vmem:[#allocation5 + $0x50] sm:$0xf]
    %v355 = vld [vmem:[#allocation5 + $0x54] sm:$0xf]
    %v356 = vld [vmem:[#allocation5 + $0x58] sm:$0xf]
    %v357 = vld [vmem:[#allocation5 + $0x5c] sm:$0xf]
    %v358 = vld [vmem:[%s5] sm:$0x1]
    %v360 = vlaneseq
    %v361 = vshrl.u32 %v360, 7
    %v362 = vsub.s32 0, %v361
    %v363 = vrot.slane %v358, %v362
    %v389 = vunpack.c.l.b16 %v334
    %v390 = vunpack.c.l.b16 %v335
    %v391 = vunpack.c.l.b16 %v336
    %v392 = vunpack.c.l.b16 %v337
    %v393 = vunpack.c.l.b16 %v338
    %v394 = vunpack.c.l.b16 %v339
    %v395 = vunpack.c.l.b16 %v340
    %v396 = vunpack.c.l.b16 %v341
    %v397 = vunpack.c.l.b16 %v342
    %v398 = vunpack.c.l.b16 %v343
    %v399 = vunpack.c.l.b16 %v344
    %v400 = vunpack.c.l.b16 %v345
    %v401 = vunpack.c.l.b16 %v346
    %v402 = vunpack.c.l.b16 %v347
    %v403 = vunpack.c.l.b16 %v348
    %v404 = vunpack.c.l.b16 %v349
    %v405 = vunpack.c.l.b16 %v350
    %v406 = vunpack.c.l.b16 %v351
    %v407 = vunpack.c.l.b16 %v352
    %v408 = vunpack.c.l.b16 %v353
    %v409 = vunpack.c.l.b16 %v354
    %v410 = vunpack.c.l.b16 %v355
    %v411 = vunpack.c.l.b16 %v356
    %v412 = vunpack.c.l.b16 %v357
    %v413 = vpack.c.b16 %v390, %v389
    %v414 = vpack.c.b16 %v392, %v391
    %v415 = vpack.c.b16 %v394, %v393
    %v416 = vpack.c.b16 %v396, %v395
    %v417 = vpack.c.b16 %v398, %v397
    %v418 = vpack.c.b16 %v400, %v399
    %v419 = vpack.c.b16 %v402, %v401
    %v420 = vpack.c.b16 %v404, %v403
    %v421 = vpack.c.b16 %v406, %v405
    %v422 = vpack.c.b16 %v408, %v407
    %v423 = vpack.c.b16 %v410, %v409
    %v424 = vpack.c.b16 %v412, %v411
    %v438 = vsel %vm325, %v331, 0
    %v441 = vsel %vm325, %v333, 0
    %443 = vmatprep.subr.bf16.mxu0 0
    %444 = vmatpush1.bf16.msra.mxu0 %v420
    %445 = vmatprep.subr.bf16.mxu0 0
    %446 = vmatpush1.bf16.msra.mxu0 %v419
    %447 = vmatprep.subr.bf16.mxu0 0
    %448 = vmatpush1.bf16.msra.mxu0 %v418
    %449 = vmatprep.subr.bf16.mxu0 0
    %450 = vmatpush1.bf16.msra.mxu0 %v417
    %451 = vmatprep.subr.bf16.mxu0 0
    %452 = vmatpush1.bf16.msra.mxu0 %v416
    %453 = vmatprep.subr.bf16.mxu0 0
    %454 = vmatpush1.bf16.msra.mxu0 %v415
    %455 = vmatprep.subr.bf16.mxu0 0
    %456 = vmatpush1.bf16.msra.mxu0 %v414
    %457 = vmatprep.subr.bf16.mxu0 0
    %458 = vmatpush1.bf16.msra.mxu0 %v413
    %459 = vmatprep.subr.bf16.mxu0 0
    %460 = vmatpush2.bf16.msra.mxu0 0
    %461 = vmatprep.subr.bf16.mxu0 0
    %462 = vmatpush2.bf16.msra.mxu0 0
    %463 = vmatprep.subr.bf16.mxu0 0
    %464 = vmatpush2.bf16.msra.mxu0 0
    %465 = vmatprep.subr.bf16.mxu0 0
    %466 = vmatpush2.bf16.msra.mxu0 0
    %467 = vmatprep.subr.bf16.mxu0 0
    %468 = vmatpush2.bf16.msra.mxu0 %v424
    %469 = vmatprep.subr.bf16.mxu0 0
    %470 = vmatpush2.bf16.msra.mxu0 %v423
    %471 = vmatprep.subr.bf16.mxu0 0
    %472 = vmatpush2.bf16.msra.mxu0 %v422
    %473 = vmatprep.subr.bf16.mxu0 0
    %474 = vmatpush2.bf16.msra.mxu0 %v421
    %475 = vmatprep.mubr.bf16.mxu0 %v438
    %476 = vmatmul.mubr.bf16.gmra.mxu0 %v330
    %v477 = vpop.f32.mrf.mxu0
    %v478 = vadd.f32 %v363, %v477
    %v479 = vpop.f32.mrf.mxu0
    %v480 = vpop.f32.mrf.mxu0
    %v481 = vadd.f32 %v363, %v480
    %v482 = vpop.f32.mrf.mxu0
    %483 = vmatprep.mubr.bf16.mxu0 %v441
    %484 = vmatmul.mubr.bf16.gmra.mxu0 %v332
    %v485 = vpop.f32.mrf.mxu0
    %v486 = vadd.f32 %v363, %v485
    %v487 = vpop.f32.mrf.mxu0
    %v488 = vpop.f32.mrf.mxu0
    %v489 = vadd.f32 %v363, %v488
    %v490 = vpop.f32.mrf.mxu0
    %491 = vdwg.mxu0
    %v492 = vmax.f32 %v478, 0.0
    %v493 = vmax.f32 %v481, 0.0
    %v494 = vmax.f32 %v486, 0.0
    %v495 = vmax.f32 %v489, 0.0
    %v496 = vld [vmem:[%s1] sm:$0xff]
    %v497 = vld [vmem:[%s1 + $0x8] sm:$0xff]
    %v498 = vld [vmem:[%s1 + $0x10] sm:$0xff]
    %v499 = vld [vmem:[%s1 + $0x18] sm:$0xff]
    %v508 = vrot.slane %v492, 7
    %v509 = vrot.slane %v496, 7
    %v510 = vrot.slane %v493, 7
    %v511 = vsel %vm266, %v508, %v510
    %v512 = vrot.slane %v497, 7
    %v513 = vsel %vm266, %v509, %v512
    %v514 = vrot.slane %v494, 7
    %v515 = vrot.slane %v498, 7
    %v516 = vrot.slane %v495, 7
    %v517 = vsel %vm266, %v514, %v516
    %v518 = vrot.slane %v499, 7
    %v519 = vsel %vm266, %v515, %v518
    %v532 = vsel %vm266, 0.0, %v508
    %v533 = vsel %vm266, 0.0, %v509
    %v534 = vsel %vm266, 0.0, %v514
    %v535 = vsel %vm266, 0.0, %v515
    %v536 = vsel %vm266, %v510, 0.0
    %v537 = vsel %vm266, %v512, 0.0
    %v538 = vsel %vm266, %v516, 0.0
    %v539 = vsel %vm266, %v518, 0.0
    %v548 = vrot.slane %v532, 1
    %v549 = vrot.slane %v511, 1
    %v550 = vsel %vm287, %v548, %v549
    %v551 = vrot.slane %v533, 1
    %v552 = vrot.slane %v513, 1
    %v553 = vsel %vm287, %v551, %v552
    %v554 = vrot.slane %v536, 1
    %v555 = vsel %vm287, %v549, %v554
    %v556 = vrot.slane %v537, 1
    %v557 = vsel %vm287, %v552, %v556
    %v558 = vrot.slane %v534, 1
    %v559 = vrot.slane %v517, 1
    %v560 = vsel %vm287, %v558, %v559
    %v561 = vrot.slane %v535, 1
    %v562 = vrot.slane %v519, 1
    %v563 = vsel %vm287, %v561, %v562
    %v564 = vrot.slane %v538, 1
    %v565 = vsel %vm287, %v559, %v564
    %v566 = vrot.slane %v539, 1
    %v567 = vsel %vm287, %v562, %v566
    %v576 = vrot.slane %v532, 2
    %v577 = vrot.slane %v511, 2
    %v578 = vsel %vm310, %v576, %v577
    %v579 = vrot.slane %v533, 2
    %v580 = vrot.slane %v513, 2
    %v581 = vsel %vm310, %v579, %v580
    %v582 = vrot.slane %v536, 2
    %v583 = vsel %vm310, %v577, %v582
    %v584 = vrot.slane %v537, 2
    %v585 = vsel %vm310, %v580, %v584
    %v586 = vrot.slane %v534, 2
    %v587 = vrot.slane %v517, 2
    %v588 = vsel %vm310, %v586, %v587
    %v589 = vrot.slane %v535, 2
    %v590 = vrot.slane %v519, 2
    %v591 = vsel %vm310, %v589, %v590
    %v592 = vrot.slane %v538, 2
    %v593 = vsel %vm310, %v587, %v592
    %v594 = vrot.slane %v539, 2
    %v595 = vsel %vm310, %v590, %v594
    %v604 = vpack.c.bf16 %v511, %v532
    %v605 = vpack.c.bf16 %v513, %v533
    %v606 = vpack.c.bf16 %v555, %v550
    %v607 = vpack.c.bf16 %v557, %v553
    %v608 = vpack.c.bf16 %v583, %v578
    %v609 = vpack.c.bf16 %v585, %v581
    %v610 = vpack.c.bf16 %v517, %v534
    %v611 = vpack.c.bf16 %v519, %v535
    %v612 = vpack.c.bf16 %v565, %v560
    %v613 = vpack.c.bf16 %v567, %v563
    %v614 = vpack.c.bf16 %v593, %v588
    %v615 = vpack.c.bf16 %v595, %v591
    %v616 = vld [vmem:[#allocation7] sm:$0xf]
    %v617 = vld [vmem:[#allocation7 + $0x4] sm:$0xf]
    %v618 = vld [vmem:[#allocation7 + $0x8] sm:$0xf]
    %v619 = vld [vmem:[#allocation7 + $0xc] sm:$0xf]
    %v620 = vld [vmem:[#allocation7 + $0x10] sm:$0xf]
    %v621 = vld [vmem:[#allocation7 + $0x14] sm:$0xf]
    %v622 = vld [vmem:[#allocation7 + $0x18] sm:$0xf]
    %v623 = vld [vmem:[#allocation7 + $0x1c] sm:$0xf]
    %v624 = vld [vmem:[#allocation7 + $0x20] sm:$0xf]
    %v625 = vld [vmem:[#allocation7 + $0x24] sm:$0xf]
    %v626 = vld [vmem:[#allocation7 + $0x28] sm:$0xf]
    %v627 = vld [vmem:[#allocation7 + $0x2c] sm:$0xf]
    %v628 = vld [vmem:[#allocation7 + $0x30] sm:$0xf]
    %v629 = vld [vmem:[#allocation7 + $0x34] sm:$0xf]
    %v630 = vld [vmem:[#allocation7 + $0x38] sm:$0xf]
    %v631 = vld [vmem:[#allocation7 + $0x3c] sm:$0xf]
    %v632 = vld [vmem:[#allocation7 + $0x40] sm:$0xf]
    %v633 = vld [vmem:[#allocation7 + $0x44] sm:$0xf]
    %v634 = vld [vmem:[#allocation7 + $0x48] sm:$0xf]
    %v635 = vld [vmem:[#allocation7 + $0x4c] sm:$0xf]
    %v636 = vld [vmem:[#allocation7 + $0x50] sm:$0xf]
    %v637 = vld [vmem:[#allocation7 + $0x54] sm:$0xf]
    %v638 = vld [vmem:[#allocation7 + $0x58] sm:$0xf]
    %v639 = vld [vmem:[#allocation7 + $0x5c] sm:$0xf]
    %v640 = vld [vmem:[#allocation7 + $0x60] sm:$0xf]
    %v641 = vld [vmem:[#allocation7 + $0x64] sm:$0xf]
    %v642 = vld [vmem:[#allocation7 + $0x68] sm:$0xf]
    %v643 = vld [vmem:[#allocation7 + $0x6c] sm:$0xf]
    %v644 = vld [vmem:[#allocation7 + $0x70] sm:$0xf]
    %v645 = vld [vmem:[#allocation7 + $0x74] sm:$0xf]
    %v646 = vld [vmem:[#allocation7 + $0x78] sm:$0xf]
    %v647 = vld [vmem:[#allocation7 + $0x7c] sm:$0xf]
    %v648 = vld [vmem:[#allocation7 + $0x80] sm:$0xf]
    %v649 = vld [vmem:[#allocation7 + $0x84] sm:$0xf]
    %v650 = vld [vmem:[#allocation7 + $0x88] sm:$0xf]
    %v651 = vld [vmem:[#allocation7 + $0x8c] sm:$0xf]
    %v652 = vld [vmem:[#allocation7 + $0x90] sm:$0xf]
    %v653 = vld [vmem:[#allocation7 + $0x94] sm:$0xf]
    %v654 = vld [vmem:[#allocation7 + $0x98] sm:$0xf]
    %v655 = vld [vmem:[#allocation7 + $0x9c] sm:$0xf]
    %v656 = vld [vmem:[#allocation7 + $0xa0] sm:$0xf]
    %v657 = vld [vmem:[#allocation7 + $0xa4] sm:$0xf]
    %v658 = vld [vmem:[#allocation7 + $0xa8] sm:$0xf]
    %v659 = vld [vmem:[#allocation7 + $0xac] sm:$0xf]
    %v660 = vld [vmem:[#allocation7 + $0xb0] sm:$0xf]
    %v661 = vld [vmem:[#allocation7 + $0xb4] sm:$0xf]
    %v662 = vld [vmem:[#allocation7 + $0xb8] sm:$0xf]
    %v663 = vld [vmem:[#allocation7 + $0xbc] sm:$0xf]
    %v664 = vld [vmem:[#allocation7 + $0xc0] sm:$0xf]
    %v665 = vld [vmem:[#allocation7 + $0xc4] sm:$0xf]
    %v666 = vld [vmem:[#allocation7 + $0xc8] sm:$0xf]
    %v667 = vld [vmem:[#allocation7 + $0xcc] sm:$0xf]
    %v668 = vld [vmem:[#allocation7 + $0xd0] sm:$0xf]
    %v669 = vld [vmem:[#allocation7 + $0xd4] sm:$0xf]
    %v670 = vld [vmem:[#allocation7 + $0xd8] sm:$0xf]
    %v671 = vld [vmem:[#allocation7 + $0xdc] sm:$0xf]
    %v672 = vld [vmem:[#allocation7 + $0xe0] sm:$0xf]
    %v673 = vld [vmem:[#allocation7 + $0xe4] sm:$0xf]
    %v674 = vld [vmem:[#allocation7 + $0xe8] sm:$0xf]
    %v675 = vld [vmem:[#allocation7 + $0xec] sm:$0xf]
    %v676 = vld [vmem:[#allocation7 + $0xf0] sm:$0xf]
    %v677 = vld [vmem:[#allocation7 + $0xf4] sm:$0xf]
    %v678 = vld [vmem:[#allocation7 + $0xf8] sm:$0xf]
    %v679 = vld [vmem:[#allocation7 + $0xfc] sm:$0xf]
    %v680 = vld [vmem:[#allocation7 + $0x100] sm:$0xf]
    %v681 = vld [vmem:[#allocation7 + $0x104] sm:$0xf]
    %v682 = vld [vmem:[#allocation7 + $0x108] sm:$0xf]
    %v683 = vld [vmem:[#allocation7 + $0x10c] sm:$0xf]
    %v684 = vld [vmem:[#allocation7 + $0x110] sm:$0xf]
    %v685 = vld [vmem:[#allocation7 + $0x114] sm:$0xf]
    %v686 = vld [vmem:[#allocation7 + $0x118] sm:$0xf]
    %v687 = vld [vmem:[#allocation7 + $0x11c] sm:$0xf]
    %v688 = vld [vmem:[#allocation7 + $0x120] sm:$0xf]
    %v689 = vld [vmem:[#allocation7 + $0x124] sm:$0xf]
    %v690 = vld [vmem:[#allocation7 + $0x128] sm:$0xf]
    %v691 = vld [vmem:[#allocation7 + $0x12c] sm:$0xf]
    %v692 = vld [vmem:[#allocation7 + $0x130] sm:$0xf]
    %v693 = vld [vmem:[#allocation7 + $0x134] sm:$0xf]
    %v694 = vld [vmem:[#allocation7 + $0x138] sm:$0xf]
    %v695 = vld [vmem:[#allocation7 + $0x13c] sm:$0xf]
    %v696 = vld [vmem:[#allocation7 + $0x140] sm:$0xf]
    %v697 = vld [vmem:[#allocation7 + $0x144] sm:$0xf]
    %v698 = vld [vmem:[#allocation7 + $0x148] sm:$0xf]
    %v699 = vld [vmem:[#allocation7 + $0x14c] sm:$0xf]
    %v700 = vld [vmem:[#allocation7 + $0x150] sm:$0xf]
    %v701 = vld [vmem:[#allocation7 + $0x154] sm:$0xf]
    %v702 = vld [vmem:[#allocation7 + $0x158] sm:$0xf]
    %v703 = vld [vmem:[#allocation7 + $0x15c] sm:$0xf]
    %v704 = vld [vmem:[#allocation7 + $0x160] sm:$0xf]
    %v705 = vld [vmem:[#allocation7 + $0x164] sm:$0xf]
    %v706 = vld [vmem:[#allocation7 + $0x168] sm:$0xf]
    %v707 = vld [vmem:[#allocation7 + $0x16c] sm:$0xf]
    %v708 = vld [vmem:[#allocation7 + $0x170] sm:$0xf]
    %v709 = vld [vmem:[#allocation7 + $0x174] sm:$0xf]
    %v710 = vld [vmem:[#allocation7 + $0x178] sm:$0xf]
    %v711 = vld [vmem:[#allocation7 + $0x17c] sm:$0xf]
    %v712 = vld [vmem:[%s7] sm:$0x1]
    %v714 = vlaneseq
    %v715 = vshrl.u32 %v714, 7
    %v716 = vsub.s32 0, %v715
    %v717 = vrot.slane %v712, %v716
    %v815 = vunpack.c.l.b16 %v616
    %v816 = vunpack.c.l.b16 %v617
    %v817 = vunpack.c.l.b16 %v618
    %v818 = vunpack.c.l.b16 %v619
    %v819 = vunpack.c.l.b16 %v620
    %v820 = vunpack.c.l.b16 %v621
    %v821 = vunpack.c.l.b16 %v622
    %v822 = vunpack.c.l.b16 %v623
    %v823 = vunpack.c.l.b16 %v624
    %v824 = vunpack.c.l.b16 %v625
    %v825 = vunpack.c.l.b16 %v626
    %v826 = vunpack.c.l.b16 %v627
    %v827 = vunpack.c.l.b16 %v628
    %v828 = vunpack.c.l.b16 %v629
    %v829 = vunpack.c.l.b16 %v630
    %v830 = vunpack.c.l.b16 %v631
    %v831 = vunpack.c.l.b16 %v632
    %v832 = vunpack.c.l.b16 %v633
    %v833 = vunpack.c.l.b16 %v634
    %v834 = vunpack.c.l.b16 %v635
    %v835 = vunpack.c.l.b16 %v636
    %v836 = vunpack.c.l.b16 %v637
    %v837 = vunpack.c.l.b16 %v638
    %v838 = vunpack.c.l.b16 %v639
    %v839 = vunpack.c.l.b16 %v640
    %v840 = vunpack.c.l.b16 %v641
    %v841 = vunpack.c.l.b16 %v642
    %v842 = vunpack.c.l.b16 %v643
    %v843 = vunpack.c.l.b16 %v644
    %v844 = vunpack.c.l.b16 %v645
    %v845 = vunpack.c.l.b16 %v646
    %v846 = vunpack.c.l.b16 %v647
    %v847 = vunpack.c.l.b16 %v648
    %v848 = vunpack.c.l.b16 %v649
    %v849 = vunpack.c.l.b16 %v650
    %v850 = vunpack.c.l.b16 %v651
    %v851 = vunpack.c.l.b16 %v652
    %v852 = vunpack.c.l.b16 %v653
    %v853 = vunpack.c.l.b16 %v654
    %v854 = vunpack.c.l.b16 %v655
    %v855 = vunpack.c.l.b16 %v656
    %v856 = vunpack.c.l.b16 %v657
    %v857 = vunpack.c.l.b16 %v658
    %v858 = vunpack.c.l.b16 %v659
    %v859 = vunpack.c.l.b16 %v660
    %v860 = vunpack.c.l.b16 %v661
    %v861 = vunpack.c.l.b16 %v662
    %v862 = vunpack.c.l.b16 %v663
    %v863 = vunpack.c.l.b16 %v664
    %v864 = vunpack.c.l.b16 %v665
    %v865 = vunpack.c.l.b16 %v666
    %v866 = vunpack.c.l.b16 %v667
    %v867 = vunpack.c.l.b16 %v668
    %v868 = vunpack.c.l.b16 %v669
    %v869 = vunpack.c.l.b16 %v670
    %v870 = vunpack.c.l.b16 %v671
    %v871 = vunpack.c.l.b16 %v672
    %v872 = vunpack.c.l.b16 %v673
    %v873 = vunpack.c.l.b16 %v674
    %v874 = vunpack.c.l.b16 %v675
    %v875 = vunpack.c.l.b16 %v676
    %v876 = vunpack.c.l.b16 %v677
    %v877 = vunpack.c.l.b16 %v678
    %v878 = vunpack.c.l.b16 %v679
    %v879 = vunpack.c.l.b16 %v680
    %v880 = vunpack.c.l.b16 %v681
    %v881 = vunpack.c.l.b16 %v682
    %v882 = vunpack.c.l.b16 %v683
    %v883 = vunpack.c.l.b16 %v684
    %v884 = vunpack.c.l.b16 %v685
    %v885 = vunpack.c.l.b16 %v686
    %v886 = vunpack.c.l.b16 %v687
    %v887 = vunpack.c.l.b16 %v688
    %v888 = vunpack.c.l.b16 %v689
    %v889 = vunpack.c.l.b16 %v690
    %v890 = vunpack.c.l.b16 %v691
    %v891 = vunpack.c.l.b16 %v692
    %v892 = vunpack.c.l.b16 %v693
    %v893 = vunpack.c.l.b16 %v694
    %v894 = vunpack.c.l.b16 %v695
    %v895 = vunpack.c.l.b16 %v696
    %v896 = vunpack.c.l.b16 %v697
    %v897 = vunpack.c.l.b16 %v698
    %v898 = vunpack.c.l.b16 %v699
    %v899 = vunpack.c.l.b16 %v700
    %v900 = vunpack.c.l.b16 %v701
    %v901 = vunpack.c.l.b16 %v702
    %v902 = vunpack.c.l.b16 %v703
    %v903 = vunpack.c.l.b16 %v704
    %v904 = vunpack.c.l.b16 %v705
    %v905 = vunpack.c.l.b16 %v706
    %v906 = vunpack.c.l.b16 %v707
    %v907 = vunpack.c.l.b16 %v708
    %v908 = vunpack.c.l.b16 %v709
    %v909 = vunpack.c.l.b16 %v710
    %v910 = vunpack.c.l.b16 %v711
    %v911 = vpack.c.b16 %v816, %v815
    %v912 = vpack.c.b16 %v818, %v817
    %v913 = vpack.c.b16 %v820, %v819
    %v914 = vpack.c.b16 %v822, %v821
    %v915 = vpack.c.b16 %v824, %v823
    %v916 = vpack.c.b16 %v826, %v825
    %v917 = vpack.c.b16 %v828, %v827
    %v918 = vpack.c.b16 %v830, %v829
    %v919 = vpack.c.b16 %v832, %v831
    %v920 = vpack.c.b16 %v834, %v833
    %v921 = vpack.c.b16 %v836, %v835
    %v922 = vpack.c.b16 %v838, %v837
    %v923 = vpack.c.b16 %v840, %v839
    %v924 = vpack.c.b16 %v842, %v841
    %v925 = vpack.c.b16 %v844, %v843
    %v926 = vpack.c.b16 %v846, %v845
    %v927 = vpack.c.b16 %v848, %v847
    %v928 = vpack.c.b16 %v850, %v849
    %v929 = vpack.c.b16 %v852, %v851
    %v930 = vpack.c.b16 %v854, %v853
    %v931 = vpack.c.b16 %v856, %v855
    %v932 = vpack.c.b16 %v858, %v857
    %v933 = vpack.c.b16 %v860, %v859
    %v934 = vpack.c.b16 %v862, %v861
    %v935 = vpack.c.b16 %v864, %v863
    %v936 = vpack.c.b16 %v866, %v865
    %v937 = vpack.c.b16 %v868, %v867
    %v938 = vpack.c.b16 %v870, %v869
    %v939 = vpack.c.b16 %v872, %v871
    %v940 = vpack.c.b16 %v874, %v873
    %v941 = vpack.c.b16 %v876, %v875
    %v942 = vpack.c.b16 %v878, %v877
    %v943 = vpack.c.b16 %v880, %v879
    %v944 = vpack.c.b16 %v882, %v881
    %v945 = vpack.c.b16 %v884, %v883
    %v946 = vpack.c.b16 %v886, %v885
    %v947 = vpack.c.b16 %v888, %v887
    %v948 = vpack.c.b16 %v890, %v889
    %v949 = vpack.c.b16 %v892, %v891
    %v950 = vpack.c.b16 %v894, %v893
    %v951 = vpack.c.b16 %v896, %v895
    %v952 = vpack.c.b16 %v898, %v897
    %v953 = vpack.c.b16 %v900, %v899
    %v954 = vpack.c.b16 %v902, %v901
    %v955 = vpack.c.b16 %v904, %v903
    %v956 = vpack.c.b16 %v906, %v905
    %v957 = vpack.c.b16 %v908, %v907
    %v958 = vpack.c.b16 %v910, %v909
    %1007 = vmatprep.subr.bf16.mxu0 0
    %1008 = vmatpush1.bf16.msra.mxu0 %v918
    %1009 = vmatprep.subr.bf16.mxu0 0
    %1010 = vmatpush1.bf16.msra.mxu0 %v917
    %1011 = vmatprep.subr.bf16.mxu0 0
    %1012 = vmatpush1.bf16.msra.mxu0 %v916
    %1013 = vmatprep.subr.bf16.mxu0 0
    %1014 = vmatpush1.bf16.msra.mxu0 %v915
    %1015 = vmatprep.subr.bf16.mxu0 0
    %1016 = vmatpush1.bf16.msra.mxu0 %v914
    %1017 = vmatprep.subr.bf16.mxu0 0
    %1018 = vmatpush1.bf16.msra.mxu0 %v913
    %1019 = vmatprep.subr.bf16.mxu0 0
    %1020 = vmatpush1.bf16.msra.mxu0 %v912
    %1021 = vmatprep.subr.bf16.mxu0 0
    %1022 = vmatpush1.bf16.msra.mxu0 %v911
    %1023 = vmatprep.subr.bf16.mxu0 0
    %1024 = vmatpush2.bf16.msra.mxu0 %v926
    %1025 = vmatprep.subr.bf16.mxu0 0
    %1026 = vmatpush2.bf16.msra.mxu0 %v925
    %1027 = vmatprep.subr.bf16.mxu0 0
    %1028 = vmatpush2.bf16.msra.mxu0 %v924
    %1029 = vmatprep.subr.bf16.mxu0 0
    %1030 = vmatpush2.bf16.msra.mxu0 %v923
    %1031 = vmatprep.subr.bf16.mxu0 0
    %1032 = vmatpush2.bf16.msra.mxu0 %v922
    %1033 = vmatprep.subr.bf16.mxu0 0
    %1034 = vmatpush2.bf16.msra.mxu0 %v921
    %1035 = vmatprep.subr.bf16.mxu0 0
    %1036 = vmatpush2.bf16.msra.mxu0 %v920
    %1037 = vmatprep.subr.bf16.mxu0 0
    %1038 = vmatpush2.bf16.msra.mxu0 %v919
    %1039 = vmatprep.mubr.bf16.mxu0 %v605
    %1040 = vmatmul.mubr.bf16.gmra.mxu0 %v604
    %v1041 = vpop.f32.mrf.mxu0
    %v1042 = vadd.f32 %v717, %v1041
    %v1043 = vpop.f32.mrf.mxu0
    %v1044 = vpop.f32.mrf.mxu0
    %v1045 = vadd.f32 %v717, %v1044
    %v1046 = vpop.f32.mrf.mxu0
    %1047 = vmatprep.mubr.bf16.mxu0 %v611
    %1048 = vmatmul.mubr.bf16.gmra.mxu0 %v610
    %v1049 = vpop.f32.mrf.mxu0
    %v1050 = vadd.f32 %v717, %v1049
    %v1051 = vpop.f32.mrf.mxu0
    %v1052 = vpop.f32.mrf.mxu0
    %v1053 = vadd.f32 %v717, %v1052
    %v1054 = vpop.f32.mrf.mxu0
    %1055 = vdwg.mxu0
    %1056 = vmatprep.subr.bf16.mxu0 0
    %1057 = vmatpush1.bf16.msra.mxu0 %v934
    %1058 = vmatprep.subr.bf16.mxu0 0
    %1059 = vmatpush1.bf16.msra.mxu0 %v933
    %1060 = vmatprep.subr.bf16.mxu0 0
    %1061 = vmatpush1.bf16.msra.mxu0 %v932
    %1062 = vmatprep.subr.bf16.mxu0 0
    %1063 = vmatpush1.bf16.msra.mxu0 %v931
    %1064 = vmatprep.subr.bf16.mxu0 0
    %1065 = vmatpush1.bf16.msra.mxu0 %v930
    %1066 = vmatprep.subr.bf16.mxu0 0
    %1067 = vmatpush1.bf16.msra.mxu0 %v929
    %1068 = vmatprep.subr.bf16.mxu0 0
    %1069 = vmatpush1.bf16.msra.mxu0 %v928
    %1070 = vmatprep.subr.bf16.mxu0 0
    %1071 = vmatpush1.bf16.msra.mxu0 %v927
    %1072 = vmatprep.subr.bf16.mxu0 0
    %1073 = vmatpush2.bf16.msra.mxu0 %v942
    %1074 = vmatprep.subr.bf16.mxu0 0
    %1075 = vmatpush2.bf16.msra.mxu0 %v941
    %1076 = vmatprep.subr.bf16.mxu0 0
    %1077 = vmatpush2.bf16.msra.mxu0 %v940
    %1078 = vmatprep.subr.bf16.mxu0 0
    %1079 = vmatpush2.bf16.msra.mxu0 %v939
    %1080 = vmatprep.subr.bf16.mxu0 0
    %1081 = vmatpush2.bf16.msra.mxu0 %v938
    %1082 = vmatprep.subr.bf16.mxu0 0
    %1083 = vmatpush2.bf16.msra.mxu0 %v937
    %1084 = vmatprep.subr.bf16.mxu0 0
    %1085 = vmatpush2.bf16.msra.mxu0 %v936
    %1086 = vmatprep.subr.bf16.mxu0 0
    %1087 = vmatpush2.bf16.msra.mxu0 %v935
    %1088 = vmatprep.mubr.bf16.mxu0 %v607
    %1089 = vmatmul.mubr.bf16.gmra.mxu0 %v606
    %v1090 = vpop.f32.mrf.mxu0
    %v1091 = vadd.f32 %v1042, %v1090
    %v1092 = vpop.f32.mrf.mxu0
    %v1093 = vpop.f32.mrf.mxu0
    %v1094 = vadd.f32 %v1045, %v1093
    %v1095 = vpop.f32.mrf.mxu0
    %1096 = vmatprep.mubr.bf16.mxu0 %v613
    %1097 = vmatmul.mubr.bf16.gmra.mxu0 %v612
    %v1098 = vpop.f32.mrf.mxu0
    %v1099 = vadd.f32 %v1050, %v1098
    %v1100 = vpop.f32.mrf.mxu0
    %v1101 = vpop.f32.mrf.mxu0
    %v1102 = vadd.f32 %v1053, %v1101
    %v1103 = vpop.f32.mrf.mxu0
    %1104 = vdwg.mxu0
    %1105 = vmatprep.subr.bf16.mxu0 0
    %1106 = vmatpush1.bf16.msra.mxu0 %v950
    %1107 = vmatprep.subr.bf16.mxu0 0
    %1108 = vmatpush1.bf16.msra.mxu0 %v949
    %1109 = vmatprep.subr.bf16.mxu0 0
    %1110 = vmatpush1.bf16.msra.mxu0 %v948
    %1111 = vmatprep.subr.bf16.mxu0 0
    %1112 = vmatpush1.bf16.msra.mxu0 %v947
    %1113 = vmatprep.subr.bf16.mxu0 0
    %1114 = vmatpush1.bf16.msra.mxu0 %v946
    %1115 = vmatprep.subr.bf16.mxu0 0
    %1116 = vmatpush1.bf16.msra.mxu0 %v945
    %1117 = vmatprep.subr.bf16.mxu0 0
    %1118 = vmatpush1.bf16.msra.mxu0 %v944
    %1119 = vmatprep.subr.bf16.mxu0 0
    %1120 = vmatpush1.bf16.msra.mxu0 %v943
    %1121 = vmatprep.subr.bf16.mxu0 0
    %1122 = vmatpush2.bf16.msra.mxu0 %v958
    %1123 = vmatprep.subr.bf16.mxu0 0
    %1124 = vmatpush2.bf16.msra.mxu0 %v957
    %1125 = vmatprep.subr.bf16.mxu0 0
    %1126 = vmatpush2.bf16.msra.mxu0 %v956
    %1127 = vmatprep.subr.bf16.mxu0 0
    %1128 = vmatpush2.bf16.msra.mxu0 %v955
    %1129 = vmatprep.subr.bf16.mxu0 0
    %1130 = vmatpush2.bf16.msra.mxu0 %v954
    %1131 = vmatprep.subr.bf16.mxu0 0
    %1132 = vmatpush2.bf16.msra.mxu0 %v953
    %1133 = vmatprep.subr.bf16.mxu0 0
    %1134 = vmatpush2.bf16.msra.mxu0 %v952
    %1135 = vmatprep.subr.bf16.mxu0 0
    %1136 = vmatpush2.bf16.msra.mxu0 %v951
    %1137 = vmatprep.mubr.bf16.mxu0 %v609
    %1138 = vmatmul.mubr.bf16.gmra.mxu0 %v608
    %v1139 = vpop.f32.mrf.mxu0
    %v1140 = vadd.f32 %v1091, %v1139
    %v1141 = vpop.f32.mrf.mxu0
    %v1142 = vpop.f32.mrf.mxu0
    %v1143 = vadd.f32 %v1094, %v1142
    %v1144 = vpop.f32.mrf.mxu0
    %1145 = vmatprep.mubr.bf16.mxu0 %v615
    %1146 = vmatmul.mubr.bf16.gmra.mxu0 %v614
    %v1147 = vpop.f32.mrf.mxu0
    %v1148 = vadd.f32 %v1099, %v1147
    %v1149 = vpop.f32.mrf.mxu0
    %v1150 = vpop.f32.mrf.mxu0
    %v1151 = vadd.f32 %v1102, %v1150
    %v1152 = vpop.f32.mrf.mxu0
    %1153 = vdwg.mxu0
    %v1154 = vmax.f32 %v1140, 0.0
    %v1155 = vmax.f32 %v1143, 0.0
    %v1156 = vmax.f32 %v1148, 0.0
    %v1157 = vmax.f32 %v1151, 0.0
    %1158 = vst [vmem:[#allocation8] sm:$0xff] %v1154
    %1159 = vst [vmem:[#allocation8 + $0x8] sm:$0xff] %v1155
    %1160 = vst [vmem:[#allocation8 + $0x10] sm:$0xff] %v1156
    %1161 = vst [vmem:[#allocation8 + $0x18] sm:$0xff] %v1157
    // Predicated region
    $region46: #{tpu_custom_call.1} parent=1 // pred_check
      _
    $region47: #{tpu_custom_call.1} parent=1 // pred_check_branch
      %1163 = sbr.rel (0) target = $region49
    $region48: #{tpu_custom_call.1} parent=1 // pred_region
      %s1165 = ssub.s32 512, 512
      %1166 = vsyncadd [#allocation4], %s1165
      %s1167 = sshll.u32 [#allocation8], 4
      %s1168 = int_to_ptr.vmem [resolvable:$true] %s1167
      %1173 = dma.vmem_to_hbm [thread:$0]  %s1168, 512, %s8, [#allocation4], 128, 128, 8
    $region49: #{tpu_custom_call.1} parent=1 // pred_fallthru
      _
    // Predicated region
    $region50: #{tpu_custom_call.1} parent=1 // pred_check
      _
    $region51: #{tpu_custom_call.1} parent=1 // pred_check_branch
      %1175 = sbr.rel (0) target = $region53
    $region52: #{tpu_custom_call.1} parent=1 // pred_region
      %1176 = dma.done [#allocation4], 512
    $region53: #{tpu_custom_call.1} parent=1 // pred_fallthru
      _
    %1177 = vsyncpa [#allocation3], 1
    %1178 = vsyncpa [#allocation6], 1
    %1179 = vsyncpa [#allocation4], 1

</llo_original>
